<compile_context>
chip_gen: v7x
topology: tpu7x:2x2x1
jax: 0.10.0
libtpu: 0.0.40
codegen_flags: <defaults>
</compile_context>

<pallas_src>
import functools

import jax
import jax.numpy as jnp
from jax.experimental import pallas as pl
from jax.experimental.pallas import tpu as pltpu

EPS_BN = 1e-5


# --------------------------------------------------------------------------------------
# Pallas kernel: fused per-channel affine (folded BN) + border fill with BN(0)
# --------------------------------------------------------------------------------------
def _bn_pad_kernel(x_ref, s_ref, b_ref, o_ref, *, pad):
    # x_ref: (1, CT, H, W)   s_ref/b_ref: (1, CT, 1, 1) f32   o_ref: (1, CT, Hp, Wp)
    s = s_ref[...]
    b = b_ref[...]
    y = x_ref[...].astype(jnp.float32) * s + b          # folded BN, computed in f32

    if pad > 0:
        _, ct, h, w = x_ref.shape
        wp = w + 2 * pad
        # Assemble the fully padded tile in registers, then store once at lane
        # offset 0 (no double-write, no masked interior store).
        side = jnp.broadcast_to(b, (1, ct, h, pad))      # left/right border columns
        row_slab = jnp.concatenate([side, y, side], axis=3)        # (1, CT, H, Wp)
        cap = jnp.broadcast_to(b, (1, ct, pad, wp))      # top/bottom border rows
        full = jnp.concatenate([cap, row_slab, cap], axis=2)       # (1, CT, Hp, Wp)
        o_ref[...] = full.astype(o_ref.dtype)
    else:
        o_ref[...] = y.astype(o_ref.dtype)


# --------------------------------------------------------------------------------------
# Wrapper: fold BN, pick generation-aware tiling, launch pallas_call
# --------------------------------------------------------------------------------------
def bn_and_pad(x, gamma, beta, running_mean, running_var, pad_pixels, eps=EPS_BN):
    """x: [B, C, H, W] -> [B, C, H+2p, W+2p], same dtype as x (eval-mode BN + pad)."""
    B, C, H, W = x.shape
    p = int(pad_pixels)
    Hp, Wp = H + 2 * p, W + 2 * p
    out_dtype = x.dtype

    # Fold BN (inference mode, running stats) into per-channel scale/bias in f32.
    # TODO(synk): training-mode BN (batch statistics + running-stat momentum update)
    # is not implemented; eval-mode running stats are used (deployment semantics).
    scale = gamma.astype(jnp.float32) / jnp.sqrt(running_var.astype(jnp.float32) + eps)
    bias = beta.astype(jnp.float32) - running_mean.astype(jnp.float32) * scale
    s4 = scale.reshape(1, C, 1, 1)
    b4 = bias.reshape(1, C, 1, 1)

    # Generation-aware VMEM budget (v5e/v6e: 128 MiB physical, v7x: 64 MiB).
    try:
        vmem_cap = int(getattr(pltpu.get_tpu_info(), "vmem_capacity_bytes", 64 << 20))
    except Exception:  # pragma: no cover - e.g. interpret mode
        vmem_cap = 64 << 20
    vmem_limit = min(vmem_cap // 2, 64 << 20)       # 64 MiB on v5e/v6e, 32 MiB on v7x
    budget = (vmem_limit * 3) // 4                  # double-buffered in+out blocks

    in_item = jnp.dtype(x.dtype).itemsize
    out_item = jnp.dtype(out_dtype).itemsize
    # double-buffered input + output blocks, plus one f32 assembled tile of headroom
    bytes_per_channel = 2 * in_item * H * W + 2 * out_item * Hp * Wp + 4 * Hp * Wp
    CT = max(1, min(C, budget // bytes_per_channel))
    # Keep the parallel grid populated (>= 4 blocks) so both v7x TensorCores get work.
    min_blocks = 4
    cblocks_target = max(1, -(-min_blocks // B))    # cdiv(min_blocks, B)
    CT = min(CT, max(1, -(-C // cblocks_target)))   # shrink CT rather than starve a TC
    grid = (B, pl.cdiv(C, CT))
    # TODO(synk): no H-axis fallback tiling; a single channel plane bigger than the
    # VMEM budget (extremely large H*W) would need an extra row grid axis.

    kern = functools.partial(_bn_pad_kernel, pad=p)
    return pl.pallas_call(
        kern,
        out_shape=jax.ShapeDtypeStruct((B, C, Hp, Wp), out_dtype),
        grid=grid,
        in_specs=[
            pl.BlockSpec((1, CT, H, W), lambda b, c: (b, c, 0, 0)),
            pl.BlockSpec((1, CT, 1, 1), lambda b, c: (0, c, 0, 0)),
            pl.BlockSpec((1, CT, 1, 1), lambda b, c: (0, c, 0, 0)),
        ],
        out_specs=pl.BlockSpec((1, CT, Hp, Wp), lambda b, c: (b, c, 0, 0)),
        compiler_params=pltpu.CompilerParams(
            dimension_semantics=("parallel", "parallel"),
            vmem_limit_bytes=vmem_limit),
    )(x, s4, b4)


# --------------------------------------------------------------------------------------
# Pure-JAX reference (mirrors the PyTorch forward, eval-mode BN)
# --------------------------------------------------------------------------------------
def bn_and_pad_reference(x, gamma, beta, running_mean, running_var, pad_pixels, eps=EPS_BN):
    scale = gamma / jnp.sqrt(running_var + eps)
    bias = beta - running_mean * scale
    y = x * scale.reshape(1, -1, 1, 1) + bias.reshape(1, -1, 1, 1)
    p = int(pad_pixels)
    if p > 0:
        y = jnp.pad(y, ((0, 0), (0, 0), (p, p), (p, p)))
        pv = bias.reshape(1, -1, 1, 1)
        y = y.at[:, :, :p, :].set(pv)
        y = y.at[:, :, -p:, :].set(pv)
        y = y.at[:, :, :, :p].set(pv)
        y = y.at[:, :, :, -p:].set(pv)
    return y.astype(x.dtype)


if __name__ == "__main__":
    B, C, H, W = 2, 4, 16, 16
    pad_pixels = 1

    key = jax.random.PRNGKey(0)
    kx, kg, kb, km, kv = jax.random.split(key, 5)
    x = jax.random.normal(kx, (B, C, H, W), dtype=jnp.float32)
    gamma = 1.0 + 0.1 * jax.random.normal(kg, (C,), dtype=jnp.float32)
    beta = 0.1 * jax.random.normal(kb, (C,), dtype=jnp.float32)
    running_mean = 0.1 * jax.random.normal(km, (C,), dtype=jnp.float32)
    running_var = 1.0 + 0.1 * jax.random.uniform(kv, (C,), dtype=jnp.float32)

    fwd = jax.jit(functools.partial(bn_and_pad, pad_pixels=pad_pixels))
    out = jax.block_until_ready(fwd(x, gamma, beta, running_mean, running_var))

    expected = bn_and_pad_reference(x, gamma, beta, running_mean, running_var, pad_pixels)
    assert out.shape == (B, C, H + 2 * pad_pixels, W + 2 * pad_pixels), out.shape
    assert out.dtype == x.dtype, out.dtype
    assert bool(jnp.all(jnp.isfinite(out)))
    assert bool(jnp.allclose(out, expected, rtol=1e-5, atol=1e-5))
    print("KERNEL_OK")
</pallas_src>

<mosaic_0001>
module attributes {stable_mosaic.version = 11 : i64} {
  func.func @_bn_pad_kernel(%arg0: i32, %arg1: i32, %arg2: memref<1x2x16x16xf32, #tpu.memory_space<vmem>>, %arg3: memref<1x2x1x1xf32, #tpu.memory_space<vmem>>, %arg4: memref<1x2x1x1xf32, #tpu.memory_space<vmem>>, %arg5: memref<1x2x18x18xf32, #tpu.memory_space<vmem>>) attributes {dimension_semantics = [#tpu.dimension_semantics<parallel>, #tpu.dimension_semantics<parallel>], iteration_bounds = array<i64: 2, 2>, scalar_prefetch = 0 : i64, scratch_operands = 0 : i64, tpu.core_type = #tpu.core_type<tc>, window_params = [{transform_indices = @transform_0, window_bounds = array<i64: 1, 2, 16, 16>}, {transform_indices = @transform_1, window_bounds = array<i64: 1, 2, 1, 1>}, {transform_indices = @transform_2, window_bounds = array<i64: 1, 2, 1, 1>}, {transform_indices = @transform_3, window_bounds = array<i64: 1, 2, 18, 18>}]} {
    %c0 = arith.constant 0 : index
    %c0_0 = arith.constant 0 : index
    %c0_1 = arith.constant 0 : index
    %c0_2 = arith.constant 0 : index
    %0 = vector.load %arg3[%c0, %c0_0, %c0_1, %c0_2] : memref<1x2x1x1xf32, #tpu.memory_space<vmem>>, vector<1x2x1x1xf32>
    %c0_3 = arith.constant 0 : index
    %c0_4 = arith.constant 0 : index
    %c0_5 = arith.constant 0 : index
    %c0_6 = arith.constant 0 : index
    %1 = vector.load %arg4[%c0_3, %c0_4, %c0_5, %c0_6] : memref<1x2x1x1xf32, #tpu.memory_space<vmem>>, vector<1x2x1x1xf32>
    %c0_7 = arith.constant 0 : index
    %c0_8 = arith.constant 0 : index
    %c0_9 = arith.constant 0 : index
    %c0_10 = arith.constant 0 : index
    %2 = vector.load %arg2[%c0_7, %c0_8, %c0_9, %c0_10] : memref<1x2x16x16xf32, #tpu.memory_space<vmem>>, vector<1x2x16x16xf32>
    %3 = vector.broadcast %0 : vector<1x2x1x1xf32> to vector<1x2x16x16xf32>
    %4 = arith.mulf %2, %3 : vector<1x2x16x16xf32>
    %5 = vector.broadcast %1 : vector<1x2x1x1xf32> to vector<1x2x16x16xf32>
    %6 = arith.addf %4, %5 : vector<1x2x16x16xf32>
    %7 = vector.shape_cast %1 : vector<1x2x1x1xf32> to vector<1x2x1x1xf32>
    %8 = vector.broadcast %7 : vector<1x2x1x1xf32> to vector<1x2x16x1xf32>
    %9 = tpu.concatenate %8, %6, %8 in 3 : vector<1x2x16x1xf32>, vector<1x2x16x16xf32>, vector<1x2x16x1xf32> -> vector<1x2x16x18xf32>
    %10 = vector.shape_cast %1 : vector<1x2x1x1xf32> to vector<1x2x1x1xf32>
    %11 = vector.broadcast %10 : vector<1x2x1x1xf32> to vector<1x2x1x18xf32>
    %12 = tpu.concatenate %11, %9, %11 in 2 : vector<1x2x1x18xf32>, vector<1x2x16x18xf32>, vector<1x2x1x18xf32> -> vector<1x2x18x18xf32>
    %c0_11 = arith.constant 0 : index
    %c0_12 = arith.constant 0 : index
    %c0_13 = arith.constant 0 : index
    %c0_14 = arith.constant 0 : index
    %13 = vector.load %arg5[%c0_11, %c0_12, %c0_13, %c0_14] : memref<1x2x18x18xf32, #tpu.memory_space<vmem>>, vector<1x2x18x18xf32>
    tpu.vector_store %arg5[%c0_11, %c0_12, %c0_13, %c0_14], %12 {strides = array<i32>} : memref<1x2x18x18xf32, #tpu.memory_space<vmem>>, vector<1x2x18x18xf32>,
    return
  }
  func.func @transform_0(%arg0: i32, %arg1: i32) -> (i32, i32, i32, i32) {
    %c0_i32 = arith.constant 0 : i32
    %c0_i32_0 = arith.constant 0 : i32
    %c0_i32_1 = arith.constant 0 : i32
    return %arg0, %arg1, %c0_i32, %c0_i32_0 : i32, i32, i32, i32
  }
  func.func @transform_1(%arg0: i32, %arg1: i32) -> (i32, i32, i32, i32) {
    %c0_i32 = arith.constant 0 : i32
    %c0_i32_0 = arith.constant 0 : i32
    %c0_i32_1 = arith.constant 0 : i32
    %c0_i32_2 = arith.constant 0 : i32
    return %c0_i32, %arg1, %c0_i32_0, %c0_i32_1 : i32, i32, i32, i32
  }
  func.func @transform_2(%arg0: i32, %arg1: i32) -> (i32, i32, i32, i32) {
    %c0_i32 = arith.constant 0 : i32
    %c0_i32_0 = arith.constant 0 : i32
    %c0_i32_1 = arith.constant 0 : i32
    %c0_i32_2 = arith.constant 0 : i32
    return %c0_i32, %arg1, %c0_i32_0, %c0_i32_1 : i32, i32, i32, i32
  }
  func.func @transform_3(%arg0: i32, %arg1: i32) -> (i32, i32, i32, i32) {
    %c0_i32 = arith.constant 0 : i32
    %c0_i32_0 = arith.constant 0 : i32
    %c0_i32_1 = arith.constant 0 : i32
    return %arg0, %arg1, %c0_i32, %c0_i32_0 : i32, i32, i32, i32
  }
}

</mosaic_0001>

<llo_original>
// kernel: bn_and_pad.1
$region0: #{bn_and_pad.1}
  #allocation0 [shape = 'u32[]', space=smem, size = 0x4, offset = 0x4, fixed_abs, tag = 'smem constant byte address 0x4 - core index']
  #allocation1 [shape = 'u32[144,128]{1,0:T(1,128)}', space=vmem, size = 0x12000, scoped, tag = 'internal scratch']
  %s0 = inlined_call_operand.hbm [shape: f32[2,4,16,16], index: 0, kind: input, shape index: {}]
  %s1 = inlined_call_operand.vmem [shape: f32[1,4,1,1], index: 1, kind: input, shape index: {}]
  %s2 = inlined_call_operand.vmem [shape: f32[1,4,1,1], index: 2, kind: input, shape index: {}]
  %s3 = inlined_call_operand.vmem [shape: f32[2,4,18,18], index: 3, kind: output, shape index: {}]
  %s4 = sld [smem:[#allocation0]]
  $region49: #{bn_and_pad.1} parent=0
    _
  %s6 = ssub.s32 1, %s4
  %s7 = scalar_select 0, %s6, %s4
  $region1: #{bn_and_pad.1} parent=0
    #allocation2 [shape = 'u8[32768]{0}', space=vmem, size = 0x8000, scoped, tag = 'input window, operand 0']
    #allocation3 [shape = 's32[2]{0}', space=sflag, size = 0x8, scoped, tag = 'scoped memory for bn_and_pad.1']
    %8 = vsyncpa [#allocation3], 0
    %s9 = scalar_lea.sflag [#allocation3], 1
    %10 = vsyncpa %s9, 0
    loop: start=0, step=1, limit=6
    $region2: #{bn_and_pad.1} parent=1 // loop_pre_header
      _
    $region3: #{bn_and_pad.1} parent=1 // loop_header
      %s12 = sphi 0, %s16
      %p13 = scmp.ge.s32.totalorder %s12, 6
      %s19 = sphi 0, %s31
      %s20 = sphi 0, %s27
      %s21 = sphi 0, %s19
      %s22 = sphi 0, %s20
      %s23 = sphi 0, %s21
      %s24 = sphi 0, %s22
      %s36 = sphi 0, %s38
      %s39 = sphi 0, %s36
      %s40 = sphi 0, %s39
      %s56 = sphi 0, %s40
      %s62 = sphi 0, %s64
      %s65 = sphi 0, %s62
      %s66 = sphi 0, %s65
      %s82 = sphi 0, %s66
      %s88 = sphi 0, %s90
      %s91 = sphi 0, %s88
      %s92 = sphi 0, %s91
      %s108 = sphi 0, %s92
      %s116 = sphi 0, %s118
      %s119 = sphi 0, %s116
      %s120 = sphi 0, %s119
      %s136 = sphi 0, %s120
    $region4: #{bn_and_pad.1} parent=1 // loop_header_branch
      %15 = sbr.rel (%p13) target = $region8
    $region5: #{bn_and_pad.1} parent=1 // loop_body
      %s17 = ssub.s32 %s12, 1
      %s18 = ssub.s32 %s12, 2
      %s25 = sadd.s32 1, %s20
      %p26 = scmp.ge.s32.totalorder %s25, 2
      %s27 = scalar_select %p26, 0, %s25
      %s28 = sadd.s32 1, %s19
      %s29 = scalar_select %p26, %s28, %s19
      %p30 = scmp.ge.s32.totalorder %s29, 2
      %s31 = scalar_select %p30, 0, %s29
      %s32 = ssub.s32 %s19, %s31
      %s33 = ssub.s32 %s20, %s27
      %s34 = sor.u32 %s32, %s33
      %p35 = scmp.eq.s32.totalorder %s34, 0
      %s37 = sadd.s32 %s36, 1
      %s38 = scalar_select %p35, %s36, %s37
      %p41 = pneg %p35
      %p42 = scmp.eq.s32.totalorder %s12, 3
      %p43 = por %p41, %p42
      %p44 = scmp.ne.s32.totalorder %s36, %s39
      %p45 = scmp.eq.s32.totalorder %s12, 0
      %p46 = por %p44, %p45
      %p47 = scmp.ne.s32.totalorder %s36, %s39
      %p48 = scmp.eq.s32.totalorder %s17, 3
      %p49 = por %p47, %p48
      %p50 = scmp.ne.s32.totalorder %s39, %s40
      %p51 = scmp.eq.s32.totalorder %s17, 0
      %p52 = por %p50, %p51
      %p53 = scmp.ne.s32.totalorder %s39, %s40
      %p54 = scmp.eq.s32.totalorder %s18, 3
      %p55 = por %p53, %p54
      %p57 = scmp.ne.s32.totalorder %s40, %s56
      %p58 = scmp.eq.s32.totalorder %s18, 0
      %p59 = por %p57, %p58
      %s60 = ssub.s32 %s20, %s27
      %p61 = scmp.eq.s32.totalorder %s60, 0
      %s63 = sadd.s32 %s62, 1
      %s64 = scalar_select %p61, %s62, %s63
      %p67 = pneg %p61
      %p68 = scmp.eq.s32.totalorder %s12, 3
      %p69 = por %p67, %p68
      %p70 = scmp.ne.s32.totalorder %s62, %s65
      %p71 = scmp.eq.s32.totalorder %s12, 0
      %p72 = por %p70, %p71
      %p73 = scmp.ne.s32.totalorder %s62, %s65
      %p74 = scmp.eq.s32.totalorder %s17, 3
      %p75 = por %p73, %p74
      %p76 = scmp.ne.s32.totalorder %s65, %s66
      %p77 = scmp.eq.s32.totalorder %s17, 0
      %p78 = por %p76, %p77
      %p79 = scmp.ne.s32.totalorder %s65, %s66
      %p80 = scmp.eq.s32.totalorder %s18, 3
      %p81 = por %p79, %p80
      %p83 = scmp.ne.s32.totalorder %s66, %s82
      %p84 = scmp.eq.s32.totalorder %s18, 0
      %p85 = por %p83, %p84
      %s86 = ssub.s32 %s20, %s27
      %p87 = scmp.eq.s32.totalorder %s86, 0
      %s89 = sadd.s32 %s88, 1
      %s90 = scalar_select %p87, %s88, %s89
      %p93 = pneg %p87
      %p94 = scmp.eq.s32.totalorder %s12, 3
      %p95 = por %p93, %p94
      %p96 = scmp.ne.s32.totalorder %s88, %s91
      %p97 = scmp.eq.s32.totalorder %s12, 0
      %p98 = por %p96, %p97
      %p99 = scmp.ne.s32.totalorder %s88, %s91
      %p100 = scmp.eq.s32.totalorder %s17, 3
      %p101 = por %p99, %p100
      %p102 = scmp.ne.s32.totalorder %s91, %s92
      %p103 = scmp.eq.s32.totalorder %s17, 0
      %p104 = por %p102, %p103
      %p105 = scmp.ne.s32.totalorder %s91, %s92
      %p106 = scmp.eq.s32.totalorder %s18, 3
      %p107 = por %p105, %p106
      %p109 = scmp.ne.s32.totalorder %s92, %s108
      %p110 = scmp.eq.s32.totalorder %s18, 0
      %p111 = por %p109, %p110
      %s112 = ssub.s32 %s19, %s31
      %s113 = ssub.s32 %s20, %s27
      %s114 = sor.u32 %s112, %s113
      %p115 = scmp.eq.s32.totalorder %s114, 0
      %s117 = sadd.s32 %s116, 1
      %s118 = scalar_select %p115, %s116, %s117
      %p121 = pneg %p115
      %p122 = scmp.eq.s32.totalorder %s12, 3
      %p123 = por %p121, %p122
      %p124 = scmp.ne.s32.totalorder %s116, %s119
      %p125 = scmp.eq.s32.totalorder %s12, 0
      %p126 = por %p124, %p125
      %p127 = scmp.ne.s32.totalorder %s116, %s119
      %p128 = scmp.eq.s32.totalorder %s17, 3
      %p129 = por %p127, %p128
      %p130 = scmp.ne.s32.totalorder %s119, %s120
      %p131 = scmp.eq.s32.totalorder %s17, 0
      %p132 = por %p130, %p131
      %p133 = scmp.ne.s32.totalorder %s119, %s120
      %p134 = scmp.eq.s32.totalorder %s18, 3
      %p135 = por %p133, %p134
      %p137 = scmp.ne.s32.totalorder %s120, %s136
      %p138 = scmp.eq.s32.totalorder %s18, 0
      %p139 = por %p137, %p138
      %p140 = scmp.le.s32.totalorder 1, %s12
      %p141 = scmp.lt.s32.totalorder %s12, 5
      %p142 = pnand %p140, %p141
      %p143 = pneg %p142
      // Predicated region
      $region9: #{bn_and_pad.1} parent=5 // pred_check
        _
      $region10: #{bn_and_pad.1} parent=5 // pred_check_branch
        %145 = sbr.rel (%p142) target = $region12
      $region11: #{bn_and_pad.1} parent=5 // pred_region
        %s146 = ssub.s32 %s12, 1
      $region12: #{bn_and_pad.1} parent=5 // pred_fallthru
        _
      %p147 = scmp.lt.s32.totalorder %s12, 4
      // Predicated region
      $region13: #{bn_and_pad.1} parent=5 // pred_check
        %p148 = pneg %p147
      $region14: #{bn_and_pad.1} parent=5 // pred_check_branch
        %150 = sbr.rel (%p148) target = $region16
      $region15: #{bn_and_pad.1} parent=5 // pred_region
        // Predicated region
        $region17: #{bn_and_pad.1} parent=15 // pred_check
          %p151 = pneg %p46
        $region18: #{bn_and_pad.1} parent=15 // pred_check_branch
          %153 = sbr.rel (%p151) target = $region20
        $region19: #{bn_and_pad.1} parent=15 // pred_region
          %s154 = sand.u32 %s36, 1
          %s155 = scalar_lea.sflag [#allocation3], %s154
          %s156 = sand.u32 %s36, 1
          %s157 = smul.addr %s156, 32
          %s158 = scalar_lea.vmem [#allocation2], %s157
          %s159 = smul.u32 2, %s20
          %s161 = ssub.s32 512, 512
          %162 = vsyncadd %s155, %s161
          %s163 = smul.addr %s159, 2
          %s164 = smul.addr %s19, 8
          %s165 = sadd.s32 %s163, %s164
          %s166 = smul.addr %s165, 128
          %s167 = scalar_lea.hbm %s0, %s166
          %s168 = sshll.u32 %s158, 4
          %s169 = int_to_ptr.vmem [resolvable:$true] %s168
          %174 = dma.hbm_to_vmem [thread:$0]  %s167, 512, %s169, %s155, 128, 128, 8
        $region20: #{bn_and_pad.1} parent=15 // pred_fallthru
          _
        // Predicated region
        $region21: #{bn_and_pad.1} parent=15 // pred_check
          %p175 = pneg %p72
        $region22: #{bn_and_pad.1} parent=15 // pred_check_branch
          %177 = sbr.rel (%p175) target = $region24
        $region23: #{bn_and_pad.1} parent=15 // pred_region
          %s178 = smul.u32 2, %s20
          %p179 = scmp.lt.s32.totalorder %s178, 3
          %s180 = scalar_select %p179, %s178, 3
          %s181 = scalar_lea.vmem %s1, %s180
          %s182 = smul.u32 2, %s20
        $region24: #{bn_and_pad.1} parent=15 // pred_fallthru
          _
        // Predicated region
        $region25: #{bn_and_pad.1} parent=15 // pred_check
          %p183 = pneg %p98
        $region26: #{bn_and_pad.1} parent=15 // pred_check_branch
          %185 = sbr.rel (%p183) target = $region28
        $region27: #{bn_and_pad.1} parent=15 // pred_region
          %s186 = smul.u32 2, %s20
          %p187 = scmp.lt.s32.totalorder %s186, 3
          %s188 = scalar_select %p187, %s186, 3
          %s189 = scalar_lea.vmem %s2, %s188
          %s190 = smul.u32 2, %s20
        $region28: #{bn_and_pad.1} parent=15 // pred_fallthru
          _
      $region16: #{bn_and_pad.1} parent=5 // pred_fallthru
        _
      %p191 = scmp.le.s32.totalorder 1, %s12
      %p192 = scmp.lt.s32.totalorder %s12, 5
      %p193 = pnand %p191, %p192
      %p194 = pneg %p193
      // Predicated region
      $region29: #{bn_and_pad.1} parent=5 // pred_check
        _
      $region30: #{bn_and_pad.1} parent=5 // pred_check_branch
        %196 = sbr.rel (%p193) target = $region32
      $region31: #{bn_and_pad.1} parent=5 // pred_region
        %s197 = ssub.s32 %s12, 1
        %s198 = sand.u32 %s39, 1
        %s199 = scalar_lea.sflag [#allocation3], %s198
        %s200 = sand.u32 %s39, 1
        %s201 = smul.addr %s200, 32
        %s202 = scalar_lea.vmem [#allocation2], %s201
        // Predicated region
        $region33: #{bn_and_pad.1} parent=31 // pred_check
          %p203 = pneg %p52
        $region34: #{bn_and_pad.1} parent=31 // pred_check_branch
          %205 = sbr.rel (%p203) target = $region36
        $region35: #{bn_and_pad.1} parent=31 // pred_region
          %206 = dma.done %s199, 512
        $region36: #{bn_and_pad.1} parent=31 // pred_fallthru
          _
        %s207 = sand.u32 %s39, 1
        %s208 = scalar_lea.sflag [#allocation3], %s207
        %s209 = sand.u32 %s39, 1
        %s210 = smul.addr %s209, 32
        %s211 = scalar_lea.vmem [#allocation2], %s210
        %p212 = pneg %p52
        %p213 = pneg %p49
        %s214 = smul.u32 2, %s22
        %p215 = scmp.lt.s32.totalorder %s214, 3
        %s216 = scalar_select %p215, %s214, 3
        %s217 = scalar_lea.vmem %s1, %s216
        %p218 = pneg %p78
        %p219 = pneg %p75
        %s220 = smul.u32 2, %s22
        %p221 = scmp.lt.s32.totalorder %s220, 3
        %s222 = scalar_select %p221, %s220, 3
        %s223 = scalar_lea.vmem %s2, %s222
        %p224 = pneg %p104
        %p225 = pneg %p101
        %p226 = pneg %p132
        %p227 = pneg %p129
        %s228 = smul.u32 2, %s22
        %p229 = scmp.lt.s32.totalorder %s21, 1
        %s230 = scalar_select %p229, %s21, 1
        %p231 = scmp.lt.s32.totalorder %s228, 3
        %s232 = scalar_select %p231, %s228, 3
        %s233 = smul.addr %s232, 3
        %s234 = smul.addr %s230, 12
        %s235 = sadd.s32 %s233, %s234
        %s236 = smul.addr %s235, 8
        %s237 = scalar_lea.vmem %s3, %s236
        %s238 = smul.u32 2, %s22
        %s239 = smul.u32 2, %s22
        %p240 = scmp.lt.s32.totalorder %s239, 3
        %s241 = scalar_select %p240, %s239, 3
        %s242 = scalar_lea.vmem %s1, %s241
        %s243 = smul.u32 2, %s22
        %s244 = smul.u32 2, %s22
        %p245 = scmp.lt.s32.totalorder %s244, 3
        %s246 = scalar_select %p245, %s244, 3
        %s247 = scalar_lea.vmem %s2, %s246
        %s248 = smul.u32 2, %s22
        %s249 = smul.u32 2, %s22
        %p250 = scmp.lt.s32.totalorder %s21, 1
        %s251 = scalar_select %p250, %s21, 1
        %p252 = scmp.lt.s32.totalorder %s249, 3
        %s253 = scalar_select %p252, %s249, 3
        %s254 = smul.addr %s253, 3
        %s255 = smul.addr %s251, 12
        %s256 = sadd.s32 %s254, %s255
        %s257 = smul.addr %s256, 8
        %s258 = scalar_lea.vmem %s3, %s257
        %s259 = smul.u32 2, %s22
        %v260 = vld [vmem:[%s242] sm:$0x1]
        %v261 = vld [vmem:[%s242 + $0x1] sm:$0x1]
        %v262 = vld [vmem:[%s247] sm:$0x1]
        %v263 = vld [vmem:[%s247 + $0x1] sm:$0x1]
        %v264 = vld [vmem:[%s202] sm:$0xff]
        %v265 = vld [vmem:[%s202 + $0x8] sm:$0xff]
        %v266 = vld [vmem:[%s202 + $0x10] sm:$0xff]
        %v267 = vld [vmem:[%s202 + $0x18] sm:$0xff]
        %v270 = vlaneseq
        %v271 = vshrl.u32 %v270, 7
        %v272 = vsub.s32 0, %v271
        %v273 = vrot.slane %v260, %v272
        %v274 = vlaneseq
        %v275 = vshrl.u32 %v274, 7
        %v276 = vsub.s32 0, %v275
        %v277 = vrot.slane %v261, %v276
        %278 = vset.pattern.permute.xlu0 0
        %279 = vperm.xlu0 %278, %v273
        %v280 = vpop.permute.xlu0 %279
        %282 = vset.pattern.permute.xlu0 0
        %283 = vperm.xlu0 %282, %v277
        %v284 = vpop.permute.xlu0 %283
        %v286 = vmul.f32 %v264, %v280
        %v287 = vmul.f32 %v265, %v280
        %v288 = vmul.f32 %v266, %v284
        %v289 = vmul.f32 %v267, %v284
        %v292 = vlaneseq
        %v293 = vshrl.u32 %v292, 7
        %v294 = vsub.s32 0, %v293
        %v295 = vrot.slane %v262, %v294
        %v296 = vlaneseq
        %v297 = vshrl.u32 %v296, 7
        %v298 = vsub.s32 0, %v297
        %v299 = vrot.slane %v263, %v298
        %300 = vset.pattern.permute.xlu0 0
        %301 = vperm.xlu0 %300, %v295
        %v302 = vpop.permute.xlu0 %301
        %304 = vset.pattern.permute.xlu0 0
        %305 = vperm.xlu0 %304, %v299
        %v306 = vpop.permute.xlu0 %305
        %v308 = vadd.f32 %v286, %v302
        %v309 = vadd.f32 %v287, %v302
        %v310 = vadd.f32 %v288, %v306
        %v311 = vadd.f32 %v289, %v306
        %318 = vrot.lane.b32.xlu0 %v308, 1
        %v319 = vpop.permute.xlu0 %318
        %320 = vrot.lane.b32.xlu0 %v309, 1
        %v321 = vpop.permute.xlu0 %320
        %322 = vrot.lane.b32.xlu0 %v310, 1
        %v323 = vpop.permute.xlu0 %322
        %324 = vrot.lane.b32.xlu0 %v311, 1
        %v325 = vpop.permute.xlu0 %324
        %330 = vrot.lane.b32.xlu0 %v295, 17
        %v331 = vpop.permute.xlu0 %330
        %332 = vrot.lane.b32.xlu0 %v299, 17
        %v333 = vpop.permute.xlu0 %332
        %vm336 = vcmask 7168
        %v337 = vsel %vm336, %v295, %v319
        %v338 = vsel %vm336, %v295, %v321
        %v339 = vsel %vm336, %v299, %v323
        %v340 = vsel %vm336, %v299, %v325
        %vm341 = vcmask 138240
        %v342 = vsel %vm341, %v337, %v331
        %v343 = vsel %vm341, %v338, %v331
        %v344 = vsel %vm341, %v339, %v333
        %v345 = vsel %vm341, %v340, %v333
        %346 = vset.pattern.permute.xlu0 0
        %347 = vperm.xlu0 %346, %v262
        %v348 = vpop.permute.xlu0 %347
        %v350 = vlaneseq
        %v351 = vshrl.u32 %v350, 7
        %v352 = vsub.s32 0, %v351
        %v353 = vrot.slane %v348, %v352
        %354 = vset.pattern.permute.xlu0 0
        %355 = vperm.xlu0 %354, %v263
        %v356 = vpop.permute.xlu0 %355
        %v358 = vlaneseq
        %v359 = vshrl.u32 %v358, 7
        %v360 = vsub.s32 0, %v359
        %v361 = vrot.slane %v356, %v360
        %vm366 = vcmask 1040384
        %v367 = vrot.slane %v342, 7
        %v368 = vrot.slane %v343, 7
        %v369 = vsel %vm366, %v367, %v368
        %v370 = vrot.slane %v344, 7
        %v371 = vrot.slane %v345, 7
        %v372 = vsel %vm366, %v370, %v371
        %v379 = vsel %vm366, %v353, %v367
        %v380 = vsel %vm366, %v361, %v370
        %v381 = vsel %vm366, %v368, %v353
        %v382 = vsel %vm366, %v371, %v361
        %vm383 = vcmask 146432
        %384 = vst.msk [vmem:[%s258] sm:$0xff] %vm383, %v379
        %385 = vst.msk [vmem:[%s258 + $0x8] sm:$0xff] %vm383, %v369
        %vm386 = vcmask 140288
        %387 = vst.msk [vmem:[%s258 + $0x10] sm:$0x3] %vm386, %v381
        %388 = vst.msk [vmem:[%s258 + $0x18] sm:$0xff] %vm383, %v380
        %389 = vst.msk [vmem:[%s258 + $0x20] sm:$0xff] %vm383, %v372
        %390 = vst.msk [vmem:[%s258 + $0x28] sm:$0x3] %vm386, %v382
        %s391 = smul.u32 2, %s22
        %p392 = scmp.lt.s32.totalorder %s21, 1
        %s393 = scalar_select %p392, %s21, 1
        %p394 = scmp.lt.s32.totalorder %s391, 3
        %s395 = scalar_select %p394, %s391, 3
        %s396 = smul.addr %s395, 3
        %s397 = smul.addr %s393, 12
        %s398 = sadd.s32 %s396, %s397
        %s399 = smul.addr %s398, 8
        %s400 = scalar_lea.vmem %s3, %s399
        // Predicated region
        $region37: #{bn_and_pad.1} parent=31 // pred_check
          %p401 = pneg %p129
        $region38: #{bn_and_pad.1} parent=31 // pred_check_branch
          %403 = sbr.rel (%p401) target = $region40
        $region39: #{bn_and_pad.1} parent=31 // pred_region
          %s404 = smul.u32 2, %s22
        $region40: #{bn_and_pad.1} parent=31 // pred_fallthru
          _
      $region32: #{bn_and_pad.1} parent=5 // pred_fallthru
        _
      %p405 = scmp.le.s32.totalorder 2, %s12
      // Predicated region
      $region41: #{bn_and_pad.1} parent=5 // pred_check
        %p406 = pneg %p405
      $region42: #{bn_and_pad.1} parent=5 // pred_check_branch
        %408 = sbr.rel (%p406) target = $region44
      $region43: #{bn_and_pad.1} parent=5 // pred_region
        %s409 = ssub.s32 %s12, 2
        // Predicated region
        $region45: #{bn_and_pad.1} parent=43 // pred_check
          %p410 = pneg %p135
        $region46: #{bn_and_pad.1} parent=43 // pred_check_branch
          %412 = sbr.rel (%p410) target = $region48
        $region47: #{bn_and_pad.1} parent=43 // pred_region
          %s413 = smul.u32 2, %s24
          %p414 = scmp.lt.s32.totalorder %s23, 1
          %s415 = scalar_select %p414, %s23, 1
          %p416 = scmp.lt.s32.totalorder %s413, 3
          %s417 = scalar_select %p416, %s413, 3
          %s418 = smul.addr %s417, 3
          %s419 = smul.addr %s415, 12
          %s420 = sadd.s32 %s418, %s419
          %s421 = smul.addr %s420, 8
          %s422 = scalar_lea.vmem %s3, %s421
        $region48: #{bn_and_pad.1} parent=43 // pred_fallthru
          _
      $region44: #{bn_and_pad.1} parent=5 // pred_fallthru
        _
    $region6: #{bn_and_pad.1} parent=1 // loop_footer
      %s16 = sadd.s32 1, %s12
    $region7: #{bn_and_pad.1} parent=1 // loop_footer_branch
      %11 = sbr.rel target = $region3
    $region8: #{bn_and_pad.1} parent=1 // loop_exit
      _
    %423 = vsyncpa [#allocation3], 1
    %s424 = scalar_lea.sflag [#allocation3], 1
    %425 = vsyncpa %s424, 1

</llo_original>
